<compile_context>
chip_gen: v7x
topology: tpu7x:2x2x1
jax: 0.10.0
libtpu: 0.0.40
codegen_flags: <defaults>
</compile_context>

<pallas_src>
import functools

import jax
import jax.numpy as jnp
from jax.experimental import pallas as pl
from jax.experimental.pallas import tpu as pltpu

LANES = 128


def _softmax_regression_kernel(wf_ref, bf_ref, w8f_ref, b8f_ref, x_ref, o_ref,
                               *, chain_dtype):
    # wf_ref : (7,) folded tanh-chain weights   (SMEM)
    # bf_ref : (7,) folded tanh-chain biases    (SMEM)
    # w8f_ref: (2,) folded linear8 weights      (SMEM)
    # b8f_ref: (2,) folded linear8 biases       (SMEM)
    # x_ref  : (block_rows, 128) lane-dense activation tile   (VMEM)
    # o_ref  : (2, block_rows, 128) lane-dense output tile    (VMEM)
    use_f32 = jnp.dtype(chain_dtype) == jnp.dtype(jnp.float32)

    t = x_ref[...]
    if not use_f32:
        t = t.astype(chain_dtype)

    # Hoist SMEM scalar reads out of the unrolled chain.
    ws = [wf_ref[i] for i in range(7)]
    bs = [bf_ref[i] for i in range(7)]
    if not use_f32:
        ws = [w.astype(chain_dtype) for w in ws]
        bs = [b.astype(chain_dtype) for b in bs]

    # Folded Linear(1,1)+Sigmoid chain: each layer is one affine + one tanh.
    for w, b in zip(ws, bs):
        t = jnp.tanh(t * w + b)

    t = t.astype(jnp.float32)

    # Folded final nn.Linear(1, 2): two full-width lane-dense stores.
    o_ref[0] = t * w8f_ref[0] + b8f_ref[0]
    o_ref[1] = t * w8f_ref[1] + b8f_ref[1]


def softmax_regression(x, w17, b17, w8, b8, *, tile_rows=2048,
                       chain_dtype=jnp.float32):
    """x: (B, 1) float32 -> (B, 2) float32, matching the PyTorch forward."""
    B = x.shape[0]

    # ---- fold sigmoid(z) = 0.5*tanh(0.5*z) + 0.5 constants into the scalars.
    # Kernel state t_k = tanh(arg_k) with h_k = 0.5*t_k + 0.5:
    #   layer 1 : arg = x   * (0.5 *w1) + 0.5 *b1
    #   layer k : arg = t   * (0.25*wk) + (0.25*wk + 0.5*bk)     (k = 2..7)
    #   layer 8 : out_j = t * (0.5*w8_j) + (0.5*w8_j + b8_j)
    w17 = w17.astype(jnp.float32)
    b17 = b17.astype(jnp.float32)
    w8 = w8.astype(jnp.float32)
    b8 = b8.astype(jnp.float32)
    wf = jnp.concatenate([0.5 * w17[:1], 0.25 * w17[1:]])
    bf = jnp.concatenate([0.5 * b17[:1], 0.25 * w17[1:] + 0.5 * b17[1:]])
    w8f = 0.5 * w8
    b8f = 0.5 * w8 + b8

    # ---- lane-dense layout: (B, 1) -> (rows_pad, 128) ----
    flat = x.reshape(-1).astype(jnp.float32)          # in_features == 1
    rows = pl.cdiv(B, LANES)
    rows8 = max(8, ((rows + 7) // 8) * 8)             # sublane multiple of 8
    block_rows = min(tile_rows, rows8)
    # Prefer >= 2 grid blocks when rows allow (v7x: shard across 2 TensorCores).
    if rows8 > 8 and rows8 // block_rows < 2:
        block_rows = max(8, ((block_rows // 2 + 7) // 8) * 8)
    rows_pad = ((rows8 + block_rows - 1) // block_rows) * block_rows
    pad = rows_pad * LANES - B
    if pad:                                            # skip the extra HBM pass
        flat = jnp.pad(flat, (0, pad))                 # when already aligned
    x2d = flat.reshape(rows_pad, LANES)

    n_blocks = rows_pad // block_rows
    n_elems = rows_pad * LANES
    smem = pl.BlockSpec(memory_space=pltpu.MemorySpace.SMEM)

    out = pl.pallas_call(
        functools.partial(_softmax_regression_kernel, chain_dtype=chain_dtype),
        out_shape=jax.ShapeDtypeStruct((2, rows_pad, LANES), jnp.float32),
        grid=(n_blocks,),
        in_specs=[
            smem, smem, smem, smem,
            pl.BlockSpec((block_rows, LANES), lambda i: (i, 0)),
        ],
        out_specs=pl.BlockSpec((2, block_rows, LANES), lambda i: (0, i, 0)),
        compiler_params=pltpu.CompilerParams(
            dimension_semantics=("parallel",),
        ),
        cost_estimate=pl.CostEstimate(
            flops=18 * n_elems,            # 7*(mul+add) + 2*(mul+add)
            transcendentals=7 * n_elems,   # 7 tanh per element
            bytes_accessed=12 * n_elems,   # 4 B read + 8 B written per element
        ),
    )(wf, bf, w8f, b8f, x2d)

    # ---- back to PyTorch layout: (2, rows_pad, 128) -> (B, 2) ----
    # (Callers that can consume (2, B) logits directly should skip this.)
    return out.reshape(2, -1)[:, :B].T


def init_params(key):
    # Mirrors _init_weights_and_biases: weights ~ N(0, 1), biases = 0.
    k = jax.random.split(key, 8)
    w17 = jnp.stack([jax.random.normal(k[i], ()) for i in range(7)]).astype(jnp.float32)
    b17 = jnp.zeros((7,), jnp.float32)
    w8 = jax.random.normal(k[7], (2,)).astype(jnp.float32)   # (out=2, in=1)
    b8 = jnp.zeros((2,), jnp.float32)
    return w17, b17, w8, b8


if __name__ == "__main__":
    key = jax.random.PRNGKey(0)
    kx, kp = jax.random.split(key)
    B = 8
    x = jax.random.normal(kx, (B, 1), dtype=jnp.float32)
    w17, b17, w8, b8 = init_params(kp)

    out = jax.block_until_ready(softmax_regression(x, w17, b17, w8, b8))

    # Pure-JAX reference (same math, no kernel).
    h = x
    for i in range(7):
        h = jax.nn.sigmoid(h * w17[i] + b17[i])
    ref = jnp.concatenate([h * w8[0] + b8[0], h * w8[1] + b8[1]], axis=1)

    assert out.shape == (B, 2)
    assert jnp.allclose(out, ref, atol=1e-5, rtol=1e-5)

    print("KERNEL_OK")
</pallas_src>

<mosaic_0001>
module attributes {stable_mosaic.version = 11 : i64} {
  func.func @_softmax_regression_kernel(%arg0: i32, %arg1: memref<7xf32, #tpu.memory_space<smem>>, %arg2: memref<7xf32, #tpu.memory_space<smem>>, %arg3: memref<2xf32, #tpu.memory_space<smem>>, %arg4: memref<2xf32, #tpu.memory_space<smem>>, %arg5: memref<8x128xf32, #tpu.memory_space<vmem>>, %arg6: memref<2x8x128xf32, #tpu.memory_space<vmem>>) attributes {dimension_semantics = [#tpu.dimension_semantics<parallel>], iteration_bounds = array<i64: 1>, scalar_prefetch = 0 : i64, scratch_operands = 0 : i64, tpu.core_type = #tpu.core_type<tc>, window_params = [{transform_indices = @transform_0, window_bounds = array<i64: 7>}, {transform_indices = @transform_1, window_bounds = array<i64: 7>}, {transform_indices = @transform_2, window_bounds = array<i64: 2>}, {transform_indices = @transform_3, window_bounds = array<i64: 2>}, {transform_indices = @transform_4, window_bounds = array<i64: 8, 128>}, {transform_indices = @transform_5, window_bounds = array<i64: 2, 8, 128>}]} {
    %c0 = arith.constant 0 : index
    %c0_0 = arith.constant 0 : index
    %0 = vector.load %arg5[%c0, %c0_0] : memref<8x128xf32, #tpu.memory_space<vmem>>, vector<8x128xf32>
    %c0_1 = arith.constant 0 : index
    %1 = memref.load %arg1[%c0_1] : memref<7xf32, #tpu.memory_space<smem>>
    %c1 = arith.constant 1 : index
    %2 = memref.load %arg1[%c1] : memref<7xf32, #tpu.memory_space<smem>>
    %c2 = arith.constant 2 : index
    %3 = memref.load %arg1[%c2] : memref<7xf32, #tpu.memory_space<smem>>
    %c3 = arith.constant 3 : index
    %4 = memref.load %arg1[%c3] : memref<7xf32, #tpu.memory_space<smem>>
    %c4 = arith.constant 4 : index
    %5 = memref.load %arg1[%c4] : memref<7xf32, #tpu.memory_space<smem>>
    %c5 = arith.constant 5 : index
    %6 = memref.load %arg1[%c5] : memref<7xf32, #tpu.memory_space<smem>>
    %c6 = arith.constant 6 : index
    %7 = memref.load %arg1[%c6] : memref<7xf32, #tpu.memory_space<smem>>
    %c0_2 = arith.constant 0 : index
    %8 = memref.load %arg2[%c0_2] : memref<7xf32, #tpu.memory_space<smem>>
    %c1_3 = arith.constant 1 : index
    %9 = memref.load %arg2[%c1_3] : memref<7xf32, #tpu.memory_space<smem>>
    %c2_4 = arith.constant 2 : index
    %10 = memref.load %arg2[%c2_4] : memref<7xf32, #tpu.memory_space<smem>>
    %c3_5 = arith.constant 3 : index
    %11 = memref.load %arg2[%c3_5] : memref<7xf32, #tpu.memory_space<smem>>
    %c4_6 = arith.constant 4 : index
    %12 = memref.load %arg2[%c4_6] : memref<7xf32, #tpu.memory_space<smem>>
    %c5_7 = arith.constant 5 : index
    %13 = memref.load %arg2[%c5_7] : memref<7xf32, #tpu.memory_space<smem>>
    %c6_8 = arith.constant 6 : index
    %14 = memref.load %arg2[%c6_8] : memref<7xf32, #tpu.memory_space<smem>>
    %15 = vector.broadcast %1 : f32 to vector<8x128xf32>
    %16 = arith.mulf %0, %15 : vector<8x128xf32>
    %17 = vector.broadcast %8 : f32 to vector<8x128xf32>
    %18 = arith.addf %16, %17 : vector<8x128xf32>
    %19 = math.tanh %18 : vector<8x128xf32>
    %20 = vector.broadcast %2 : f32 to vector<8x128xf32>
    %21 = arith.mulf %19, %20 : vector<8x128xf32>
    %22 = vector.broadcast %9 : f32 to vector<8x128xf32>
    %23 = arith.addf %21, %22 : vector<8x128xf32>
    %24 = math.tanh %23 : vector<8x128xf32>
    %25 = vector.broadcast %3 : f32 to vector<8x128xf32>
    %26 = arith.mulf %24, %25 : vector<8x128xf32>
    %27 = vector.broadcast %10 : f32 to vector<8x128xf32>
    %28 = arith.addf %26, %27 : vector<8x128xf32>
    %29 = math.tanh %28 : vector<8x128xf32>
    %30 = vector.broadcast %4 : f32 to vector<8x128xf32>
    %31 = arith.mulf %29, %30 : vector<8x128xf32>
    %32 = vector.broadcast %11 : f32 to vector<8x128xf32>
    %33 = arith.addf %31, %32 : vector<8x128xf32>
    %34 = math.tanh %33 : vector<8x128xf32>
    %35 = vector.broadcast %5 : f32 to vector<8x128xf32>
    %36 = arith.mulf %34, %35 : vector<8x128xf32>
    %37 = vector.broadcast %12 : f32 to vector<8x128xf32>
    %38 = arith.addf %36, %37 : vector<8x128xf32>
    %39 = math.tanh %38 : vector<8x128xf32>
    %40 = vector.broadcast %6 : f32 to vector<8x128xf32>
    %41 = arith.mulf %39, %40 : vector<8x128xf32>
    %42 = vector.broadcast %13 : f32 to vector<8x128xf32>
    %43 = arith.addf %41, %42 : vector<8x128xf32>
    %44 = math.tanh %43 : vector<8x128xf32>
    %45 = vector.broadcast %7 : f32 to vector<8x128xf32>
    %46 = arith.mulf %44, %45 : vector<8x128xf32>
    %47 = vector.broadcast %14 : f32 to vector<8x128xf32>
    %48 = arith.addf %46, %47 : vector<8x128xf32>
    %49 = math.tanh %48 : vector<8x128xf32>
    %c0_9 = arith.constant 0 : index
    %50 = memref.load %arg3[%c0_9] : memref<2xf32, #tpu.memory_space<smem>>
    %51 = vector.broadcast %50 : f32 to vector<8x128xf32>
    %52 = arith.mulf %49, %51 : vector<8x128xf32>
    %c0_10 = arith.constant 0 : index
    %53 = memref.load %arg4[%c0_10] : memref<2xf32, #tpu.memory_space<smem>>
    %54 = vector.broadcast %53 : f32 to vector<8x128xf32>
    %55 = arith.addf %52, %54 : vector<8x128xf32>
    %c0_11 = arith.constant 0 : index
    %c0_12 = arith.constant 0 : index
    %c0_13 = arith.constant 0 : index
    %56 = vector.load %arg6[%c0_11, %c0_12, %c0_13] : memref<2x8x128xf32, #tpu.memory_space<vmem>>, vector<1x8x128xf32>
    %57 = vector.shape_cast %56 : vector<1x8x128xf32> to vector<8x128xf32>
    %58 = vector.shape_cast %55 : vector<8x128xf32> to vector<1x8x128xf32>
    tpu.vector_store %arg6[%c0_11, %c0_12, %c0_13], %58 {strides = array<i32>} : memref<2x8x128xf32, #tpu.memory_space<vmem>>, vector<1x8x128xf32>,
    %c1_14 = arith.constant 1 : index
    %59 = memref.load %arg3[%c1_14] : memref<2xf32, #tpu.memory_space<smem>>
    %60 = vector.broadcast %59 : f32 to vector<8x128xf32>
    %61 = arith.mulf %49, %60 : vector<8x128xf32>
    %c1_15 = arith.constant 1 : index
    %62 = memref.load %arg4[%c1_15] : memref<2xf32, #tpu.memory_space<smem>>
    %63 = vector.broadcast %62 : f32 to vector<8x128xf32>
    %64 = arith.addf %61, %63 : vector<8x128xf32>
    %c1_16 = arith.constant 1 : index
    %c0_17 = arith.constant 0 : index
    %c0_18 = arith.constant 0 : index
    %65 = vector.load %arg6[%c1_16, %c0_17, %c0_18] : memref<2x8x128xf32, #tpu.memory_space<vmem>>, vector<1x8x128xf32>
    %66 = vector.shape_cast %65 : vector<1x8x128xf32> to vector<8x128xf32>
    %67 = vector.shape_cast %64 : vector<8x128xf32> to vector<1x8x128xf32>
    tpu.vector_store %arg6[%c1_16, %c0_17, %c0_18], %67 {strides = array<i32>} : memref<2x8x128xf32, #tpu.memory_space<vmem>>, vector<1x8x128xf32>,
    return
  }
  func.func @transform_0(%arg0: i32) -> i32 {
    %c0_i32 = arith.constant 0 : i32
    %c0_i32_0 = arith.constant 0 : i32
    return %c0_i32 : i32
  }
  func.func @transform_1(%arg0: i32) -> i32 {
    %c0_i32 = arith.constant 0 : i32
    %c0_i32_0 = arith.constant 0 : i32
    return %c0_i32 : i32
  }
  func.func @transform_2(%arg0: i32) -> i32 {
    %c0_i32 = arith.constant 0 : i32
    %c0_i32_0 = arith.constant 0 : i32
    return %c0_i32 : i32
  }
  func.func @transform_3(%arg0: i32) -> i32 {
    %c0_i32 = arith.constant 0 : i32
    %c0_i32_0 = arith.constant 0 : i32
    return %c0_i32 : i32
  }
  func.func @transform_4(%arg0: i32) -> (i32, i32) {
    %c0_i32 = arith.constant 0 : i32
    %c0_i32_0 = arith.constant 0 : i32
    return %arg0, %c0_i32 : i32, i32
  }
  func.func @transform_5(%arg0: i32) -> (i32, i32, i32) {
    %c0_i32 = arith.constant 0 : i32
    %c0_i32_0 = arith.constant 0 : i32
    %c0_i32_1 = arith.constant 0 : i32
    return %c0_i32, %arg0, %c0_i32_0 : i32, i32, i32
  }
}

</mosaic_0001>

<llo_original>
// kernel: tpu_custom_call.1
$region0: #{tpu_custom_call.1}
  #allocation0 [shape = 'u32[]', space=smem, size = 0x4, offset = 0x4, fixed_abs, tag = 'smem constant byte address 0x4 - core index']
  #allocation1 [shape = 'u32[144,128]{1,0:T(1,128)}', space=vmem, size = 0x12000, scoped, tag = 'internal scratch']
  %s0 = inlined_call_operand.hbm [shape: f32[7], index: 0, kind: input, shape index: {}]
  %s1 = inlined_call_operand.vmem [shape: f32[7], index: 1, kind: input, shape index: {}]
  %s2 = inlined_call_operand.vmem [shape: f32[2], index: 2, kind: input, shape index: {}]
  %s3 = inlined_call_operand.vmem [shape: f32[2], index: 3, kind: input, shape index: {}]
  %s4 = inlined_call_operand.vmem [shape: f32[8,128], index: 4, kind: input, shape index: {}]
  %s5 = inlined_call_operand.hbm [shape: f32[2,8,128], index: 5, kind: output, shape index: {}]
  %s6 = sld [smem:[#allocation0]]
  $region46: #{tpu_custom_call.1} parent=0
    _
  %s8 = ssub.s32 1, %s6
  %s9 = scalar_select 0, %s8, %s6
  $region1: #{tpu_custom_call.1} parent=0
    #allocation2 [shape = 'u8[512]{0}', space=smem, size = 0x200, scoped, tag = 'input window, operand 0, single buffered']
    #allocation3 [shape = 's32[1]{0}', space=sflag, size = 0x4, scoped, tag = 'scoped memory for tpu_custom_call.1']
    #allocation4 [shape = 's32[1]{0}', space=sflag, size = 0x4, scoped, tag = 'scoped memory for tpu_custom_call.1']
    #allocation5 [shape = 's32[1]{0}', space=sflag, size = 0x4, scoped, tag = 'scoped memory for tpu_custom_call.1']
    #allocation6 [shape = 'u8[512]{0}', space=smem, size = 0x200, scoped, tag = 'input window, operand 1, single buffered']
    #allocation7 [shape = 'u8[512]{0}', space=smem, size = 0x200, scoped, tag = 'input window, operand 2, single buffered']
    #allocation8 [shape = 's32[1]{0}', space=sflag, size = 0x4, scoped, tag = 'scoped memory for tpu_custom_call.1']
    #allocation9 [shape = 'u8[512]{0}', space=smem, size = 0x200, scoped, tag = 'input window, operand 3, single buffered']
    #allocation10 [shape = 'u8[8192]{0}', space=vmem, size = 0x2000, scoped, tag = 'output window, operand 0, single buffered']
    %10 = vsyncpa [#allocation4], 0
    %11 = vsyncpa [#allocation5], 0
    %12 = vsyncpa [#allocation8], 0
    %13 = vsyncpa [#allocation3], 0
    // Predicated region
    $region2: #{tpu_custom_call.1} parent=1 // pred_check
      _
    $region3: #{tpu_custom_call.1} parent=1 // pred_check_branch
      %15 = sbr.rel (0) target = $region5
    $region4: #{tpu_custom_call.1} parent=1 // pred_region
      %s17 = ssub.s32 16, 16
      %18 = vsyncadd [#allocation4], %s17
      %21 = dma.hbm_to_smem %s0, 16, [#allocation2], [#allocation4]
    $region5: #{tpu_custom_call.1} parent=1 // pred_fallthru
      _
    // Predicated region
    $region6: #{tpu_custom_call.1} parent=1 // pred_check
      _
    $region7: #{tpu_custom_call.1} parent=1 // pred_check_branch
      %23 = sbr.rel (0) target = $region9
    $region8: #{tpu_custom_call.1} parent=1 // pred_region
      %s25 = ssub.s32 16, 16
      %26 = vsyncadd [#allocation5], %s25
      %s28 = sshll.u32 %s1, 4
      %s29 = int_to_ptr.vmem [resolvable:$true] %s28
      %31 = dma.vmem_to_smem %s29, 16, [#allocation6], [#allocation5]
    $region9: #{tpu_custom_call.1} parent=1 // pred_fallthru
      _
    // Predicated region
    $region10: #{tpu_custom_call.1} parent=1 // pred_check
      _
    $region11: #{tpu_custom_call.1} parent=1 // pred_check_branch
      %33 = sbr.rel (0) target = $region13
    $region12: #{tpu_custom_call.1} parent=1 // pred_region
      %s35 = ssub.s32 16, 16
      %36 = vsyncadd [#allocation8], %s35
      %s38 = sshll.u32 %s2, 4
      %s39 = int_to_ptr.vmem [resolvable:$true] %s38
      %41 = dma.vmem_to_smem %s39, 16, [#allocation7], [#allocation8]
    $region13: #{tpu_custom_call.1} parent=1 // pred_fallthru
      _
    // Predicated region
    $region14: #{tpu_custom_call.1} parent=1 // pred_check
      _
    $region15: #{tpu_custom_call.1} parent=1 // pred_check_branch
      %43 = sbr.rel (0) target = $region17
    $region16: #{tpu_custom_call.1} parent=1 // pred_region
      %s45 = ssub.s32 16, 16
      %46 = vsyncadd [#allocation8], %s45
      %s48 = sshll.u32 %s3, 4
      %s49 = int_to_ptr.vmem [resolvable:$true] %s48
      %51 = dma.vmem_to_smem %s49, 16, [#allocation9], [#allocation8]
    $region17: #{tpu_custom_call.1} parent=1 // pred_fallthru
      _
    // Predicated region
    $region18: #{tpu_custom_call.1} parent=1 // pred_check
      _
    $region19: #{tpu_custom_call.1} parent=1 // pred_check_branch
      %53 = sbr.rel (0) target = $region21
    $region20: #{tpu_custom_call.1} parent=1 // pred_region
      _
    $region21: #{tpu_custom_call.1} parent=1 // pred_fallthru
      _
    // Predicated region
    $region22: #{tpu_custom_call.1} parent=1 // pred_check
      _
    $region23: #{tpu_custom_call.1} parent=1 // pred_check_branch
      %55 = sbr.rel (0) target = $region25
    $region24: #{tpu_custom_call.1} parent=1 // pred_region
      %56 = dma.done [#allocation4], 16
    $region25: #{tpu_custom_call.1} parent=1 // pred_fallthru
      _
    // Predicated region
    $region26: #{tpu_custom_call.1} parent=1 // pred_check
      _
    $region27: #{tpu_custom_call.1} parent=1 // pred_check_branch
      %58 = sbr.rel (0) target = $region29
    $region28: #{tpu_custom_call.1} parent=1 // pred_region
      %59 = dma.done [#allocation5], 16
    $region29: #{tpu_custom_call.1} parent=1 // pred_fallthru
      _
    // Predicated region
    $region30: #{tpu_custom_call.1} parent=1 // pred_check
      _
    $region31: #{tpu_custom_call.1} parent=1 // pred_check_branch
      %61 = sbr.rel (0) target = $region33
    $region32: #{tpu_custom_call.1} parent=1 // pred_region
      %62 = dma.done [#allocation8], 16
    $region33: #{tpu_custom_call.1} parent=1 // pred_fallthru
      _
    // Predicated region
    $region34: #{tpu_custom_call.1} parent=1 // pred_check
      _
    $region35: #{tpu_custom_call.1} parent=1 // pred_check_branch
      %64 = sbr.rel (0) target = $region37
    $region36: #{tpu_custom_call.1} parent=1 // pred_region
      %65 = dma.done [#allocation8], 16
    $region37: #{tpu_custom_call.1} parent=1 // pred_fallthru
      _
    %66 = sfence
    %v67 = vld [vmem:[%s4] sm:$0xff]
    %s68 = sld [smem:[#allocation2]]
    %s69 = sld [smem:[#allocation2 + $0x1]]
    %s70 = sld [smem:[#allocation2 + $0x2]]
    %s71 = sld [smem:[#allocation2 + $0x3]]
    %s72 = sld [smem:[#allocation2 + $0x4]]
    %s73 = sld [smem:[#allocation2 + $0x5]]
    %s74 = sld [smem:[#allocation2 + $0x6]]
    %s75 = sld [smem:[#allocation6]]
    %s76 = sld [smem:[#allocation6 + $0x1]]
    %s77 = sld [smem:[#allocation6 + $0x2]]
    %s78 = sld [smem:[#allocation6 + $0x3]]
    %s79 = sld [smem:[#allocation6 + $0x4]]
    %s80 = sld [smem:[#allocation6 + $0x5]]
    %s81 = sld [smem:[#allocation6 + $0x6]]
    %v82 = vstv %s68
    %v83 = vmul.f32 %v67, %v82
    %v84 = vstv %s75
    %v85 = vadd.f32 %v83, %v84
    %v86 = vtanh.pop %v85
    %v87 = vstv %s69
    %v88 = vmul.f32 %v86, %v87
    %v89 = vstv %s76
    %v90 = vadd.f32 %v88, %v89
    %v91 = vtanh.pop %v90
    %v92 = vstv %s70
    %v93 = vmul.f32 %v91, %v92
    %v94 = vstv %s77
    %v95 = vadd.f32 %v93, %v94
    %v96 = vtanh.pop %v95
    %v97 = vstv %s71
    %v98 = vmul.f32 %v96, %v97
    %v99 = vstv %s78
    %v100 = vadd.f32 %v98, %v99
    %v101 = vtanh.pop %v100
    %v102 = vstv %s72
    %v103 = vmul.f32 %v101, %v102
    %v104 = vstv %s79
    %v105 = vadd.f32 %v103, %v104
    %v106 = vtanh.pop %v105
    %v107 = vstv %s73
    %v108 = vmul.f32 %v106, %v107
    %v109 = vstv %s80
    %v110 = vadd.f32 %v108, %v109
    %v111 = vtanh.pop %v110
    %v112 = vstv %s74
    %v113 = vmul.f32 %v111, %v112
    %v114 = vstv %s81
    %v115 = vadd.f32 %v113, %v114
    %v116 = vtanh.pop %v115
    %s117 = sld [smem:[#allocation7]]
    %v118 = vstv %s117
    %v119 = vmul.f32 %v116, %v118
    %s120 = sld [smem:[#allocation9]]
    %v121 = vstv %s120
    %v122 = vadd.f32 %v119, %v121
    %123 = vst [vmem:[#allocation10] sm:$0xff] %v122
    %s124 = sld [smem:[#allocation7 + $0x1]]
    %v125 = vstv %s124
    %v126 = vmul.f32 %v116, %v125
    %s127 = sld [smem:[#allocation9 + $0x1]]
    %v128 = vstv %s127
    %v129 = vadd.f32 %v126, %v128
    %s130 = scalar_lea.vmem [#allocation10], 8
    %131 = vst [vmem:[%s130] sm:$0xff] %v129
    // Predicated region
    $region38: #{tpu_custom_call.1} parent=1 // pred_check
      _
    $region39: #{tpu_custom_call.1} parent=1 // pred_check_branch
      %133 = sbr.rel (0) target = $region41
    $region40: #{tpu_custom_call.1} parent=1 // pred_region
      %s135 = ssub.s32 256, 256
      %136 = vsyncadd [#allocation3], %s135
      %s137 = sshll.u32 [#allocation10], 4
      %s138 = int_to_ptr.vmem [resolvable:$true] %s137
      %143 = dma.vmem_to_hbm [thread:$0]  %s138, 256, %s5, [#allocation3], 128, 128, 8
    $region41: #{tpu_custom_call.1} parent=1 // pred_fallthru
      _
    // Predicated region
    $region42: #{tpu_custom_call.1} parent=1 // pred_check
      _
    $region43: #{tpu_custom_call.1} parent=1 // pred_check_branch
      %145 = sbr.rel (0) target = $region45
    $region44: #{tpu_custom_call.1} parent=1 // pred_region
      %146 = dma.done [#allocation3], 256
    $region45: #{tpu_custom_call.1} parent=1 // pred_fallthru
      _
    %147 = vsyncpa [#allocation3], 1
    %148 = vsyncpa [#allocation4], 1
    %149 = vsyncpa [#allocation5], 1
    %150 = vsyncpa [#allocation8], 1

</llo_original>
